<compile_context>
chip_gen: v7x
topology: tpu7x:2x2x1
jax: 0.10.0
libtpu: 0.0.40
codegen_flags: <defaults>
</compile_context>

<pallas_src>
import functools

import jax
import jax.numpy as jnp
from jax.experimental import pallas as pl
from jax.experimental.pallas import tpu as pltpu


def _softplus_thresh20(v):
    # matches torch.nn.functional.softplus(v, beta=1, threshold=20);
    # clamp before exp so it stays NaN-free under jax.grad as well.
    return jnp.where(v > 20.0, v, jnp.log1p(jnp.exp(jnp.minimum(v, 20.0))))


def prepare_task_shared_params(phi_mu, phi_logvar, phi_bias_mu, phi_bias_logvar):
    """One-time (per parameter update) weight transform, off the hot path.

    Returns:
      w_blk:       (2K, 2L) block_diag(phi_mu, softplus(phi_logvar)^2) so the
                   kernel can issue ONE full-width MXU matmul per tile.
      packed_bias: (1, 2L)  [phi_bias_mu | softplus(phi_bias_logvar)^2]
    """
    w_sigma2 = jnp.square(_softplus_thresh20(phi_logvar))
    k, l = phi_mu.shape
    zeros = jnp.zeros((k, l), phi_mu.dtype)
    w_blk = jnp.concatenate(
        [jnp.concatenate([phi_mu, zeros], axis=1),
         jnp.concatenate([zeros, w_sigma2], axis=1)],
        axis=0)                                                  # (2K, 2L)
    bias_sigma2 = jnp.square(_softplus_thresh20(phi_bias_logvar))
    packed_bias = jnp.concatenate([phi_bias_mu, bias_sigma2], axis=-1)  # (1, 2L)
    return w_blk, packed_bias


def _task_shared_kernel(x_ref, wblk_ref, bias_ref, mu_ref, var_ref):
    x = x_ref[...]                                   # (TM, K)  f32
    xx = jnp.concatenate([x, x * x], axis=-1)        # (TM, 2K) lane concat (cheap)
    # single block-diagonal matmul: [x | x^2] @ blkdiag(W_mu, W_sigma2)
    res = jnp.dot(xx, wblk_ref[...],
                  preferred_element_type=jnp.float32) + bias_ref[...]   # (TM, 2L)
    l = mu_ref.shape[1]
    # two independent lane-dense output streams (no packed slab / wrapper split)
    mu_ref[...] = res[:, :l]
    var_ref[...] = res[:, l:]


_TILE_MENU = (128, 512, 2048, 4096)


def _pick_tile(n, tm_cap=None):
    """Largest menu tile that still gives >= 2 grid steps (v7x megacore),
    falling back to the smallest tile for tiny batches. Fixed menu => no
    recompile churn across batch sizes."""
    tile = _TILE_MENU[0]
    for t in reversed(_TILE_MENU):
        if n > t:          # guarantees pl.cdiv(n, t) >= 2
            tile = t
            break
    if tm_cap is not None:
        allowed = [t for t in _TILE_MENU if t <= tm_cap] or [_TILE_MENU[0]]
        tile = min(tile, allowed[-1])
    return tile


@functools.partial(jax.jit, static_argnames=("tm",))
def _task_shared_pallas(x, w_blk, packed_bias, *, tm):
    n, d_feature = x.shape
    two_k, two_l = w_blk.shape
    d_latent = two_l // 2
    grid = (pl.cdiv(n, tm),)   # ragged last block handled by Pallas masking

    z_mu, z_var = pl.pallas_call(
        _task_shared_kernel,
        out_shape=(jax.ShapeDtypeStruct((n, d_latent), jnp.float32),
                   jax.ShapeDtypeStruct((n, d_latent), jnp.float32)),
        grid=grid,
        in_specs=[
            pl.BlockSpec((tm, d_feature), lambda i: (i, 0)),   # x tile
            pl.BlockSpec((two_k, two_l), lambda i: (0, 0)),    # block-diag W (resident)
            pl.BlockSpec((1, two_l), lambda i: (0, 0)),        # packed bias (resident)
        ],
        out_specs=(pl.BlockSpec((tm, d_latent), lambda i: (i, 0)),
                   pl.BlockSpec((tm, d_latent), lambda i: (i, 0))),
        compiler_params=pltpu.CompilerParams(
            dimension_semantics=("parallel",),
            vmem_limit_bytes=32 * 1024 * 1024,   # v5e default scoped is only 16 MiB
        ),
    )(x, w_blk, packed_bias)
    return z_mu, z_var


def task_shared_forward(x, w_blk, packed_bias, z_repeat, usefor, d_latent, tm=None):
    """Eval-mode forward. Weights must be pre-transformed by
    prepare_task_shared_params (softplus + block-diag hoisted off the hot path)."""
    n = x.shape[0]
    tile = _pick_tile(n, tm)
    z_mu, z_var = _task_shared_pallas(x, w_blk, packed_bias, tm=tile)

    if usefor == 'c':
        return z_mu, z_var
    elif usefor == 'z':
        # eval mode: z = z_mu.expand(z_repeat, N, d_latent).reshape(-1, d_latent)
        # (kept in XLA; negligible vs. the kernel)
        z = jnp.broadcast_to(z_mu[None, :, :], (z_repeat, n, d_latent))
        z = z.reshape(-1, d_latent)
        return z, z_mu, z_var
    else:
        raise ValueError(usefor)


if __name__ == "__main__":
    key = jax.random.PRNGKey(0)
    k_x, k_mu, k_lv, k_bmu, k_blv, k_x2 = jax.random.split(key, 6)

    # small shapes consistent with the module
    N = 8
    d_feature = 32
    d_latent = 128
    z_repeat = 3
    rho = -3.0

    x = jax.random.normal(k_x, (N, d_feature), dtype=jnp.float32)
    phi_mu = 0.1 * jax.random.normal(k_mu, (d_feature, d_latent), dtype=jnp.float32)
    phi_logvar = rho + 0.1 * jax.random.normal(k_lv, (d_feature, d_latent), dtype=jnp.float32)
    phi_bias_mu = 0.1 * jax.random.normal(k_bmu, (1, d_latent), dtype=jnp.float32)
    phi_bias_logvar = rho + 0.1 * jax.random.normal(k_blv, (1, d_latent), dtype=jnp.float32)

    # one-time parameter preparation (softplus + block-diag, off the hot path)
    w_blk, packed_bias = prepare_task_shared_params(
        phi_mu, phi_logvar, phi_bias_mu, phi_bias_logvar)
    jax.block_until_ready((w_blk, packed_bias))

    # pure-JAX reference (torch-style softplus with threshold=20)
    sp = lambda v: jnp.where(v > 20.0, v, jnp.log1p(jnp.exp(jnp.minimum(v, 20.0))))
    ref_mu = x @ phi_mu + phi_bias_mu
    ref_var = (x * x) @ (sp(phi_logvar) ** 2) + sp(phi_bias_logvar) ** 2

    # 'c' branch (small batch -> single ragged grid step with tile 128)
    z_mu, z_var = task_shared_forward(
        x, w_blk, packed_bias, z_repeat, 'c', d_latent)
    jax.block_until_ready((z_mu, z_var))
    assert jnp.allclose(z_mu, ref_mu, atol=1e-5, rtol=1e-5)
    assert jnp.allclose(z_var, ref_var, atol=1e-5, rtol=1e-5)

    # 'z' branch (eval-mode expand)
    z, z_mu2, z_var2 = task_shared_forward(
        x, w_blk, packed_bias, z_repeat, 'z', d_latent)
    jax.block_until_ready((z, z_mu2, z_var2))
    assert z.shape == (z_repeat * N, d_latent)
    assert jnp.allclose(z, jnp.tile(ref_mu, (z_repeat, 1)), atol=1e-5, rtol=1e-5)

    # exercise the multi-step grid + masked ragged last block (no padding path)
    N2 = 300
    x2 = jax.random.normal(k_x2, (N2, d_feature), dtype=jnp.float32)
    z_mu3, z_var3 = task_shared_forward(
        x2, w_blk, packed_bias, z_repeat, 'c', d_latent)
    jax.block_until_ready((z_mu3, z_var3))
    ref_mu3 = x2 @ phi_mu + phi_bias_mu
    ref_var3 = (x2 * x2) @ (sp(phi_logvar) ** 2) + sp(phi_bias_logvar) ** 2
    assert jnp.allclose(z_mu3, ref_mu3, atol=1e-5, rtol=1e-5)
    assert jnp.allclose(z_var3, ref_var3, atol=1e-5, rtol=1e-5)

    print("KERNEL_OK")
</pallas_src>

<mosaic_0001>
module attributes {stable_mosaic.version = 11 : i64} {
  func.func @_task_shared_kernel(%arg0: i32, %arg1: memref<128x32xf32, #tpu.memory_space<vmem>>, %arg2: memref<64x256xf32, #tpu.memory_space<vmem>>, %arg3: memref<1x256xf32, #tpu.memory_space<vmem>>, %arg4: memref<128x128xf32, #tpu.memory_space<vmem>>, %arg5: memref<128x128xf32, #tpu.memory_space<vmem>>) attributes {dimension_semantics = [#tpu.dimension_semantics<parallel>], iteration_bounds = array<i64: 1>, scalar_prefetch = 0 : i64, scratch_operands = 0 : i64, tpu.core_type = #tpu.core_type<tc>, window_params = [{transform_indices = @transform_0, window_bounds = array<i64: 128, 32>}, {pipeline_mode = #tpu.pipeline_mode<synchronous>, transform_indices = @transform_1, window_bounds = array<i64: 64, 256>}, {pipeline_mode = #tpu.pipeline_mode<synchronous>, transform_indices = @transform_2, window_bounds = array<i64: 1, 256>}, {transform_indices = @transform_3, window_bounds = array<i64: 128, 128>}, {transform_indices = @transform_4, window_bounds = array<i64: 128, 128>}]} {
    %c0 = arith.constant 0 : index
    %c0_0 = arith.constant 0 : index
    %0 = vector.load %arg1[%c0, %c0_0] : memref<128x32xf32, #tpu.memory_space<vmem>>, vector<128x32xf32>
    %1 = arith.mulf %0, %0 : vector<128x32xf32>
    %2 = tpu.concatenate %0, %1 in 1 : vector<128x32xf32>, vector<128x32xf32> -> vector<128x64xf32>
    %c0_1 = arith.constant 0 : index
    %c0_2 = arith.constant 0 : index
    %3 = vector.load %arg2[%c0_1, %c0_2] : memref<64x256xf32, #tpu.memory_space<vmem>>, vector<64x256xf32>
    %cst = arith.constant dense<0.000000e+00> : vector<128x256xf32>
    %4 = tpu.matmul %2, %3, %cst {dimension_numbers = #tpu.dot_dimension_numbers<[1], [0], [0], [1], [0, 0, 1, 1], [], []>} : vector<128x64xf32>, vector<64x256xf32>, vector<128x256xf32> -> vector<128x256xf32>
    %c0_3 = arith.constant 0 : index
    %c0_4 = arith.constant 0 : index
    %5 = vector.load %arg3[%c0_3, %c0_4] : memref<1x256xf32, #tpu.memory_space<vmem>>, vector<1x256xf32>
    %6 = vector.broadcast %5 : vector<1x256xf32> to vector<128x256xf32>
    %7 = arith.addf %4, %6 : vector<128x256xf32>
    %8 = vector.extract_strided_slice %7 {offsets = [0, 0], sizes = [128, 128], strides = [1, 1]} : vector<128x256xf32> to vector<128x128xf32>
    %c0_5 = arith.constant 0 : index
    %c0_6 = arith.constant 0 : index
    %9 = vector.load %arg4[%c0_5, %c0_6] : memref<128x128xf32, #tpu.memory_space<vmem>>, vector<128x128xf32>
    tpu.vector_store %arg4[%c0_5, %c0_6], %8 {strides = array<i32>} : memref<128x128xf32, #tpu.memory_space<vmem>>, vector<128x128xf32>,
    %10 = vector.extract_strided_slice %7 {offsets = [0, 128], sizes = [128, 128], strides = [1, 1]} : vector<128x256xf32> to vector<128x128xf32>
    %c0_7 = arith.constant 0 : index
    %c0_8 = arith.constant 0 : index
    %11 = vector.load %arg5[%c0_7, %c0_8] : memref<128x128xf32, #tpu.memory_space<vmem>>, vector<128x128xf32>
    tpu.vector_store %arg5[%c0_7, %c0_8], %10 {strides = array<i32>} : memref<128x128xf32, #tpu.memory_space<vmem>>, vector<128x128xf32>,
    return
  }
  func.func @transform_0(%arg0: i32) -> (i32, i32) {
    %c0_i32 = arith.constant 0 : i32
    %c0_i32_0 = arith.constant 0 : i32
    return %arg0, %c0_i32 : i32, i32
  }
  func.func @transform_1(%arg0: i32) -> (i32, i32) {
    %c0_i32 = arith.constant 0 : i32
    %c0_i32_0 = arith.constant 0 : i32
    %c0_i32_1 = arith.constant 0 : i32
    return %c0_i32, %c0_i32_0 : i32, i32
  }
  func.func @transform_2(%arg0: i32) -> (i32, i32) {
    %c0_i32 = arith.constant 0 : i32
    %c0_i32_0 = arith.constant 0 : i32
    %c0_i32_1 = arith.constant 0 : i32
    return %c0_i32, %c0_i32_0 : i32, i32
  }
  func.func @transform_3(%arg0: i32) -> (i32, i32) {
    %c0_i32 = arith.constant 0 : i32
    %c0_i32_0 = arith.constant 0 : i32
    return %arg0, %c0_i32 : i32, i32
  }
  func.func @transform_4(%arg0: i32) -> (i32, i32) {
    %c0_i32 = arith.constant 0 : i32
    %c0_i32_0 = arith.constant 0 : i32
    return %arg0, %c0_i32 : i32, i32
  }
}

</mosaic_0001>

<llo_original>
// kernel: _task_shared_pallas.1
$region0: #{_task_shared_pallas.1}
  #allocation0 [shape = 'u32[]', space=smem, size = 0x4, offset = 0x4, fixed_abs, tag = 'smem constant byte address 0x4 - core index']
  #allocation1 [shape = 'u32[144,128]{1,0:T(1,128)}', space=vmem, size = 0x12000, scoped, tag = 'internal scratch']
  %s0 = inlined_call_operand.hbm [shape: f32[8,32], index: 0, kind: input, shape index: {}]
  %s1 = inlined_call_operand.hbm [shape: f32[64,256], index: 1, kind: input, shape index: {}]
  %s2 = inlined_call_operand.vmem [shape: f32[1,256], index: 2, kind: input, shape index: {}]
  %s3 = inlined_call_operand.hbm [shape: f32[8,128], index: 3, kind: output, shape index: {0}]
  %s4 = inlined_call_operand.hbm [shape: f32[8,128], index: 4, kind: output, shape index: {1}]
  %5 = xla_tuple %s3, %s4
  %s6 = sld [smem:[#allocation0]]
  $region38: #{_task_shared_pallas.1} parent=0
    _
  %s8 = ssub.s32 1, %s6
  %s9 = scalar_select 0, %s8, %s6
  $region1: #{_task_shared_pallas.1} parent=0
    #allocation2 [shape = 'u8[65536]{0}', space=vmem, size = 0x10000, scoped, tag = 'input window, operand 0, single buffered']
    #allocation3 [shape = 's32[1]{0}', space=sflag, size = 0x4, scoped, tag = 'scoped memory for _task_shared_pallas.1']
    #allocation4 [shape = 's32[1]{0}', space=sflag, size = 0x4, scoped, tag = 'scoped memory for _task_shared_pallas.1']
    #allocation5 [shape = 'u8[65536]{0}', space=vmem, size = 0x10000, scoped, tag = 'input window, operand 1, single buffered']
    #allocation6 [shape = 's32[1]{0}', space=sflag, size = 0x4, scoped, tag = 'scoped memory for _task_shared_pallas.1']
    #allocation7 [shape = 'u8[65536]{0}', space=vmem, size = 0x10000, scoped, tag = 'output window, operand 0, single buffered']
    #allocation8 [shape = 'u8[65536]{0}', space=vmem, size = 0x10000, scoped, tag = 'output window, operand 1, single buffered']
    #allocation9 [shape = 's32[1]{0}', space=sflag, size = 0x4, scoped, tag = 'scoped memory for _task_shared_pallas.1']
    %10 = vsyncpa [#allocation3], 0
    %11 = vsyncpa [#allocation6], 0
    %12 = vsyncpa [#allocation4], 0
    %13 = vsyncpa [#allocation9], 0
    // Predicated region
    $region2: #{_task_shared_pallas.1} parent=1 // pred_check
      _
    $region3: #{_task_shared_pallas.1} parent=1 // pred_check_branch
      %15 = sbr.rel (0) target = $region5
    $region4: #{_task_shared_pallas.1} parent=1 // pred_region
      %s17 = ssub.s32 2048, 128
      %18 = vsyncadd [#allocation3], %s17
      %s19 = sshll.u32 [#allocation2], 4
      %s20 = int_to_ptr.vmem [resolvable:$true] %s19
      %25 = dma.hbm_to_vmem [thread:$0]  %s0, 128, %s20, [#allocation3], 128, 128, 8
    $region5: #{_task_shared_pallas.1} parent=1 // pred_fallthru
      _
    // Predicated region
    $region6: #{_task_shared_pallas.1} parent=1 // pred_check
      _
    $region7: #{_task_shared_pallas.1} parent=1 // pred_check_branch
      %27 = sbr.rel (0) target = $region9
    $region8: #{_task_shared_pallas.1} parent=1 // pred_region
      %s29 = ssub.s32 2048, 2048
      %30 = vsyncadd [#allocation6], %s29
      %s31 = sshll.u32 [#allocation5], 4
      %s32 = int_to_ptr.vmem [resolvable:$true] %s31
      %37 = dma.hbm_to_vmem [thread:$0]  %s1, 2048, %s32, [#allocation6], 256, 256, 16
    $region9: #{_task_shared_pallas.1} parent=1 // pred_fallthru
      _
    // Predicated region
    $region10: #{_task_shared_pallas.1} parent=1 // pred_check
      _
    $region11: #{_task_shared_pallas.1} parent=1 // pred_check_branch
      %39 = sbr.rel (0) target = $region13
    $region12: #{_task_shared_pallas.1} parent=1 // pred_region
      _
    $region13: #{_task_shared_pallas.1} parent=1 // pred_fallthru
      _
    // Predicated region
    $region14: #{_task_shared_pallas.1} parent=1 // pred_check
      _
    $region15: #{_task_shared_pallas.1} parent=1 // pred_check_branch
      %41 = sbr.rel (0) target = $region17
    $region16: #{_task_shared_pallas.1} parent=1 // pred_region
      %42 = dma.done [#allocation3], 2048
    $region17: #{_task_shared_pallas.1} parent=1 // pred_fallthru
      _
    // Predicated region
    $region18: #{_task_shared_pallas.1} parent=1 // pred_check
      _
    $region19: #{_task_shared_pallas.1} parent=1 // pred_check_branch
      %44 = sbr.rel (0) target = $region21
    $region20: #{_task_shared_pallas.1} parent=1 // pred_region
      %45 = dma.done [#allocation6], 2048
    $region21: #{_task_shared_pallas.1} parent=1 // pred_fallthru
      _
    %v46 = vld [vmem:[#allocation2] sm:$0xff]
    %v47 = vld [vmem:[#allocation2 + $0x8] sm:$0xff]
    %v48 = vld [vmem:[#allocation2 + $0x10] sm:$0xff]
    %v49 = vld [vmem:[#allocation2 + $0x18] sm:$0xff]
    %v50 = vld [vmem:[#allocation2 + $0x20] sm:$0xff]
    %v51 = vld [vmem:[#allocation2 + $0x28] sm:$0xff]
    %v52 = vld [vmem:[#allocation2 + $0x30] sm:$0xff]
    %v53 = vld [vmem:[#allocation2 + $0x38] sm:$0xff]
    %v54 = vld [vmem:[#allocation2 + $0x40] sm:$0xff]
    %v55 = vld [vmem:[#allocation2 + $0x48] sm:$0xff]
    %v56 = vld [vmem:[#allocation2 + $0x50] sm:$0xff]
    %v57 = vld [vmem:[#allocation2 + $0x58] sm:$0xff]
    %v58 = vld [vmem:[#allocation2 + $0x60] sm:$0xff]
    %v59 = vld [vmem:[#allocation2 + $0x68] sm:$0xff]
    %v60 = vld [vmem:[#allocation2 + $0x70] sm:$0xff]
    %v61 = vld [vmem:[#allocation2 + $0x78] sm:$0xff]
    %v62 = vmul.f32 %v46, %v46
    %v63 = vmul.f32 %v47, %v47
    %v64 = vmul.f32 %v48, %v48
    %v65 = vmul.f32 %v49, %v49
    %v66 = vmul.f32 %v50, %v50
    %v67 = vmul.f32 %v51, %v51
    %v68 = vmul.f32 %v52, %v52
    %v69 = vmul.f32 %v53, %v53
    %v70 = vmul.f32 %v54, %v54
    %v71 = vmul.f32 %v55, %v55
    %v72 = vmul.f32 %v56, %v56
    %v73 = vmul.f32 %v57, %v57
    %v74 = vmul.f32 %v58, %v58
    %v75 = vmul.f32 %v59, %v59
    %v76 = vmul.f32 %v60, %v60
    %v77 = vmul.f32 %v61, %v61
    %94 = vrot.lane.b32.xlu0 %v62, 32
    %v95 = vpop.permute.xlu0 %94
    %96 = vrot.lane.b32.xlu0 %v63, 32
    %v97 = vpop.permute.xlu0 %96
    %98 = vrot.lane.b32.xlu0 %v64, 32
    %v99 = vpop.permute.xlu0 %98
    %100 = vrot.lane.b32.xlu0 %v65, 32
    %v101 = vpop.permute.xlu0 %100
    %102 = vrot.lane.b32.xlu0 %v66, 32
    %v103 = vpop.permute.xlu0 %102
    %104 = vrot.lane.b32.xlu0 %v67, 32
    %v105 = vpop.permute.xlu0 %104
    %106 = vrot.lane.b32.xlu0 %v68, 32
    %v107 = vpop.permute.xlu0 %106
    %108 = vrot.lane.b32.xlu0 %v69, 32
    %v109 = vpop.permute.xlu0 %108
    %110 = vrot.lane.b32.xlu0 %v70, 32
    %v111 = vpop.permute.xlu0 %110
    %112 = vrot.lane.b32.xlu0 %v71, 32
    %v113 = vpop.permute.xlu0 %112
    %114 = vrot.lane.b32.xlu0 %v72, 32
    %v115 = vpop.permute.xlu0 %114
    %116 = vrot.lane.b32.xlu0 %v73, 32
    %v117 = vpop.permute.xlu0 %116
    %118 = vrot.lane.b32.xlu0 %v74, 32
    %v119 = vpop.permute.xlu0 %118
    %120 = vrot.lane.b32.xlu0 %v75, 32
    %v121 = vpop.permute.xlu0 %120
    %122 = vrot.lane.b32.xlu0 %v76, 32
    %v123 = vpop.permute.xlu0 %122
    %124 = vrot.lane.b32.xlu0 %v77, 32
    %v125 = vpop.permute.xlu0 %124
    %vm142 = vcmask 261120
    %v143 = vsel %vm142, %v46, %v95
    %v144 = vsel %vm142, %v47, %v97
    %v145 = vsel %vm142, %v48, %v99
    %v146 = vsel %vm142, %v49, %v101
    %v147 = vsel %vm142, %v50, %v103
    %v148 = vsel %vm142, %v51, %v105
    %v149 = vsel %vm142, %v52, %v107
    %v150 = vsel %vm142, %v53, %v109
    %v151 = vsel %vm142, %v54, %v111
    %v152 = vsel %vm142, %v55, %v113
    %v153 = vsel %vm142, %v56, %v115
    %v154 = vsel %vm142, %v57, %v117
    %v155 = vsel %vm142, %v58, %v119
    %v156 = vsel %vm142, %v59, %v121
    %v157 = vsel %vm142, %v60, %v123
    %v158 = vsel %vm142, %v61, %v125
    %v159 = vld [vmem:[#allocation5] sm:$0xff]
    %v160 = vld [vmem:[#allocation5 + $0x8] sm:$0xff]
    %v161 = vld [vmem:[#allocation5 + $0x10] sm:$0xff]
    %v162 = vld [vmem:[#allocation5 + $0x18] sm:$0xff]
    %v163 = vld [vmem:[#allocation5 + $0x20] sm:$0xff]
    %v164 = vld [vmem:[#allocation5 + $0x28] sm:$0xff]
    %v165 = vld [vmem:[#allocation5 + $0x30] sm:$0xff]
    %v166 = vld [vmem:[#allocation5 + $0x38] sm:$0xff]
    %v167 = vld [vmem:[#allocation5 + $0x40] sm:$0xff]
    %v168 = vld [vmem:[#allocation5 + $0x48] sm:$0xff]
    %v169 = vld [vmem:[#allocation5 + $0x50] sm:$0xff]
    %v170 = vld [vmem:[#allocation5 + $0x58] sm:$0xff]
    %v171 = vld [vmem:[#allocation5 + $0x60] sm:$0xff]
    %v172 = vld [vmem:[#allocation5 + $0x68] sm:$0xff]
    %v173 = vld [vmem:[#allocation5 + $0x70] sm:$0xff]
    %v174 = vld [vmem:[#allocation5 + $0x78] sm:$0xff]
    %v175 = vld [vmem:[%s2] sm:$0x3]
    %v177 = vlaneseq
    %v178 = vshrl.u32 %v177, 7
    %v179 = vsub.s32 0, %v178
    %v180 = vrot.slane %v175, %v179
    %v181 = vlaneseq
    %v182 = vshrl.u32 %v181, 7
    %v183 = vsub.s32 1, %v182
    %v184 = vrot.slane %v175, %v183
    %vm187 = vcmask 523264
    %v189 = vsel %vm187, %v143, 0
    %v192 = vsel %vm187, %v144, 0
    %v195 = vsel %vm187, %v145, 0
    %v198 = vsel %vm187, %v146, 0
    %v201 = vsel %vm187, %v147, 0
    %v204 = vsel %vm187, %v148, 0
    %v207 = vsel %vm187, %v149, 0
    %v210 = vsel %vm187, %v150, 0
    %v213 = vsel %vm187, %v151, 0
    %v216 = vsel %vm187, %v152, 0
    %v219 = vsel %vm187, %v153, 0
    %v222 = vsel %vm187, %v154, 0
    %v225 = vsel %vm187, %v155, 0
    %v228 = vsel %vm187, %v156, 0
    %v231 = vsel %vm187, %v157, 0
    %v234 = vsel %vm187, %v158, 0
    %236 = vmatprep.subr.mxu0 %v160
    %237 = vmatpush1.msra.mxu0 %v159
    %238 = vmatprep.subr.mxu0 %v162
    %239 = vmatpush1.msra.mxu0 %v161
    %240 = vmatprep.subr.mxu0 %v164
    %241 = vmatpush1.msra.mxu0 %v163
    %242 = vmatprep.subr.mxu0 %v166
    %243 = vmatpush1.msra.mxu0 %v165
    %244 = vmatprep.subr.mxu0 %v168
    %245 = vmatpush1.msra.mxu0 %v167
    %246 = vmatprep.subr.mxu0 %v170
    %247 = vmatpush1.msra.mxu0 %v169
    %248 = vmatprep.subr.mxu0 %v172
    %249 = vmatpush1.msra.mxu0 %v171
    %250 = vmatprep.subr.mxu0 %v174
    %251 = vmatpush1.msra.mxu0 %v173
    %252 = vmatprep.subr.mxu0 0.0
    %253 = vmatpush1.msra.mxu0 0.0
    %254 = vmatprep.subr.mxu0 0.0
    %255 = vmatpush1.msra.mxu0 0.0
    %256 = vmatprep.subr.mxu0 0.0
    %257 = vmatpush1.msra.mxu0 0.0
    %258 = vmatprep.subr.mxu0 0.0
    %259 = vmatpush1.msra.mxu0 0.0
    %260 = vmatprep.subr.mxu0 0.0
    %261 = vmatpush1.msra.mxu0 0.0
    %262 = vmatprep.subr.mxu0 0.0
    %263 = vmatpush1.msra.mxu0 0.0
    %264 = vmatprep.subr.mxu0 0.0
    %265 = vmatpush1.msra.mxu0 0.0
    %266 = vmatprep.subr.mxu0 0.0
    %267 = vmatpush1.msra.mxu0 0.0
    %268 = vmatprep.subr.mxu0 0.0
    %269 = vmatpush1.msra.mxu0 0.0
    %270 = vmatprep.subr.mxu0 0.0
    %271 = vmatpush1.msra.mxu0 0.0
    %272 = vmatprep.subr.mxu0 0.0
    %273 = vmatpush1.msra.mxu0 0.0
    %274 = vmatprep.subr.mxu0 0.0
    %275 = vmatpush1.msra.mxu0 0.0
    %276 = vmatprep.subr.mxu0 0.0
    %277 = vmatpush1.msra.mxu0 0.0
    %278 = vmatprep.subr.mxu0 0.0
    %279 = vmatpush1.msra.mxu0 0.0
    %280 = vmatprep.subr.mxu0 0.0
    %281 = vmatpush1.msra.mxu0 0.0
    %282 = vmatprep.subr.mxu0 0.0
    %283 = vmatpush1.msra.mxu0 0.0
    %284 = vmatprep.subr.mxu0 0.0
    %285 = vmatpush1.msra.mxu0 0.0
    %286 = vmatprep.subr.mxu0 0.0
    %287 = vmatpush1.msra.mxu0 0.0
    %288 = vmatprep.subr.mxu0 0.0
    %289 = vmatpush1.msra.mxu0 0.0
    %290 = vmatprep.subr.mxu0 0.0
    %291 = vmatpush1.msra.mxu0 0.0
    %292 = vmatprep.subr.mxu0 0.0
    %293 = vmatpush1.msra.mxu0 0.0
    %294 = vmatprep.subr.mxu0 0.0
    %295 = vmatpush1.msra.mxu0 0.0
    %296 = vmatprep.subr.mxu0 0.0
    %297 = vmatpush1.msra.mxu0 0.0
    %298 = vmatprep.subr.mxu0 0.0
    %299 = vmatpush1.msra.mxu0 0.0
    %300 = vmatprep.mubr.f32.mxu0 0.0
    %301 = vmatmul.mubr.f32.gmra.mrb[0].mxu0 %v189
    %v302 = vpop.f32.mrb[0].mxu0
    %v303 = vadd.f32 %v180, %v302
    %v304 = vpop.f32.mrb[0].mxu0
    %v305 = vadd.f32 %v184, %v304
    %306 = vmatprep.mubr.f32.mxu0 0.0
    %307 = vmatmul.mubr.f32.gmra.mrb[0].mxu0 %v192
    %v308 = vpop.f32.mrb[0].mxu0
    %v309 = vadd.f32 %v180, %v308
    %v310 = vpop.f32.mrb[0].mxu0
    %v311 = vadd.f32 %v184, %v310
    %312 = vmatprep.mubr.f32.mxu0 0.0
    %313 = vmatmul.mubr.f32.gmra.mrb[0].mxu0 %v195
    %v314 = vpop.f32.mrb[0].mxu0
    %v315 = vadd.f32 %v180, %v314
    %v316 = vpop.f32.mrb[0].mxu0
    %v317 = vadd.f32 %v184, %v316
    %318 = vmatprep.mubr.f32.mxu0 0.0
    %319 = vmatmul.mubr.f32.gmra.mrb[0].mxu0 %v198
    %v320 = vpop.f32.mrb[0].mxu0
    %v321 = vadd.f32 %v180, %v320
    %v322 = vpop.f32.mrb[0].mxu0
    %v323 = vadd.f32 %v184, %v322
    %324 = vmatprep.mubr.f32.mxu0 0.0
    %325 = vmatmul.mubr.f32.gmra.mrb[0].mxu0 %v201
    %v326 = vpop.f32.mrb[0].mxu0
    %v327 = vadd.f32 %v180, %v326
    %v328 = vpop.f32.mrb[0].mxu0
    %v329 = vadd.f32 %v184, %v328
    %330 = vmatprep.mubr.f32.mxu0 0.0
    %331 = vmatmul.mubr.f32.gmra.mrb[0].mxu0 %v204
    %v332 = vpop.f32.mrb[0].mxu0
    %v333 = vadd.f32 %v180, %v332
    %v334 = vpop.f32.mrb[0].mxu0
    %v335 = vadd.f32 %v184, %v334
    %336 = vmatprep.mubr.f32.mxu0 0.0
    %337 = vmatmul.mubr.f32.gmra.mrb[0].mxu0 %v207
    %v338 = vpop.f32.mrb[0].mxu0
    %v339 = vadd.f32 %v180, %v338
    %v340 = vpop.f32.mrb[0].mxu0
    %v341 = vadd.f32 %v184, %v340
    %342 = vmatprep.mubr.f32.mxu0 0.0
    %343 = vmatmul.mubr.f32.gmra.mrb[0].mxu0 %v210
    %v344 = vpop.f32.mrb[0].mxu0
    %v345 = vadd.f32 %v180, %v344
    %v346 = vpop.f32.mrb[0].mxu0
    %v347 = vadd.f32 %v184, %v346
    %348 = vmatprep.mubr.f32.mxu0 0.0
    %349 = vmatmul.mubr.f32.gmra.mrb[0].mxu0 %v213
    %v350 = vpop.f32.mrb[0].mxu0
    %v351 = vadd.f32 %v180, %v350
    %v352 = vpop.f32.mrb[0].mxu0
    %v353 = vadd.f32 %v184, %v352
    %354 = vmatprep.mubr.f32.mxu0 0.0
    %355 = vmatmul.mubr.f32.gmra.mrb[0].mxu0 %v216
    %v356 = vpop.f32.mrb[0].mxu0
    %v357 = vadd.f32 %v180, %v356
    %v358 = vpop.f32.mrb[0].mxu0
    %v359 = vadd.f32 %v184, %v358
    %360 = vmatprep.mubr.f32.mxu0 0.0
    %361 = vmatmul.mubr.f32.gmra.mrb[0].mxu0 %v219
    %v362 = vpop.f32.mrb[0].mxu0
    %v363 = vadd.f32 %v180, %v362
    %v364 = vpop.f32.mrb[0].mxu0
    %v365 = vadd.f32 %v184, %v364
    %366 = vmatprep.mubr.f32.mxu0 0.0
    %367 = vmatmul.mubr.f32.gmra.mrb[0].mxu0 %v222
    %v368 = vpop.f32.mrb[0].mxu0
    %v369 = vadd.f32 %v180, %v368
    %v370 = vpop.f32.mrb[0].mxu0
    %v371 = vadd.f32 %v184, %v370
    %372 = vmatprep.mubr.f32.mxu0 0.0
    %373 = vmatmul.mubr.f32.gmra.mrb[0].mxu0 %v225
    %v374 = vpop.f32.mrb[0].mxu0
    %v375 = vadd.f32 %v180, %v374
    %v376 = vpop.f32.mrb[0].mxu0
    %v377 = vadd.f32 %v184, %v376
    %378 = vmatprep.mubr.f32.mxu0 0.0
    %379 = vmatmul.mubr.f32.gmra.mrb[0].mxu0 %v228
    %v380 = vpop.f32.mrb[0].mxu0
    %v381 = vadd.f32 %v180, %v380
    %v382 = vpop.f32.mrb[0].mxu0
    %v383 = vadd.f32 %v184, %v382
    %384 = vmatprep.mubr.f32.mxu0 0.0
    %385 = vmatmul.mubr.f32.gmra.mrb[0].mxu0 %v231
    %v386 = vpop.f32.mrb[0].mxu0
    %v387 = vadd.f32 %v180, %v386
    %v388 = vpop.f32.mrb[0].mxu0
    %v389 = vadd.f32 %v184, %v388
    %390 = vmatprep.mubr.f32.mxu0 0.0
    %391 = vmatmul.mubr.f32.gmra.mrb[0].mxu0 %v234
    %v392 = vpop.f32.mrb[0].mxu0
    %v393 = vadd.f32 %v180, %v392
    %v394 = vpop.f32.mrb[0].mxu0
    %v395 = vadd.f32 %v184, %v394
    %396 = vdwg.mxu0
    %397 = vst [vmem:[#allocation7] sm:$0xff] %v303
    %398 = vst [vmem:[#allocation7 + $0x8] sm:$0xff] %v309
    %399 = vst [vmem:[#allocation7 + $0x10] sm:$0xff] %v315
    %400 = vst [vmem:[#allocation7 + $0x18] sm:$0xff] %v321
    %401 = vst [vmem:[#allocation7 + $0x20] sm:$0xff] %v327
    %402 = vst [vmem:[#allocation7 + $0x28] sm:$0xff] %v333
    %403 = vst [vmem:[#allocation7 + $0x30] sm:$0xff] %v339
    %404 = vst [vmem:[#allocation7 + $0x38] sm:$0xff] %v345
    %405 = vst [vmem:[#allocation7 + $0x40] sm:$0xff] %v351
    %406 = vst [vmem:[#allocation7 + $0x48] sm:$0xff] %v357
    %407 = vst [vmem:[#allocation7 + $0x50] sm:$0xff] %v363
    %408 = vst [vmem:[#allocation7 + $0x58] sm:$0xff] %v369
    %409 = vst [vmem:[#allocation7 + $0x60] sm:$0xff] %v375
    %410 = vst [vmem:[#allocation7 + $0x68] sm:$0xff] %v381
    %411 = vst [vmem:[#allocation7 + $0x70] sm:$0xff] %v387
    %412 = vst [vmem:[#allocation7 + $0x78] sm:$0xff] %v393
    %413 = vst [vmem:[#allocation8] sm:$0xff] %v305
    %414 = vst [vmem:[#allocation8 + $0x8] sm:$0xff] %v311
    %415 = vst [vmem:[#allocation8 + $0x10] sm:$0xff] %v317
    %416 = vst [vmem:[#allocation8 + $0x18] sm:$0xff] %v323
    %417 = vst [vmem:[#allocation8 + $0x20] sm:$0xff] %v329
    %418 = vst [vmem:[#allocation8 + $0x28] sm:$0xff] %v335
    %419 = vst [vmem:[#allocation8 + $0x30] sm:$0xff] %v341
    %420 = vst [vmem:[#allocation8 + $0x38] sm:$0xff] %v347
    %421 = vst [vmem:[#allocation8 + $0x40] sm:$0xff] %v353
    %422 = vst [vmem:[#allocation8 + $0x48] sm:$0xff] %v359
    %423 = vst [vmem:[#allocation8 + $0x50] sm:$0xff] %v365
    %424 = vst [vmem:[#allocation8 + $0x58] sm:$0xff] %v371
    %425 = vst [vmem:[#allocation8 + $0x60] sm:$0xff] %v377
    %426 = vst [vmem:[#allocation8 + $0x68] sm:$0xff] %v383
    %427 = vst [vmem:[#allocation8 + $0x70] sm:$0xff] %v389
    %428 = vst [vmem:[#allocation8 + $0x78] sm:$0xff] %v395
    // Predicated region
    $region22: #{_task_shared_pallas.1} parent=1 // pred_check
      _
    $region23: #{_task_shared_pallas.1} parent=1 // pred_check_branch
      %430 = sbr.rel (0) target = $region25
    $region24: #{_task_shared_pallas.1} parent=1 // pred_region
      %s432 = ssub.s32 2048, 128
      %433 = vsyncadd [#allocation4], %s432
      %s434 = sshll.u32 [#allocation7], 4
      %s435 = int_to_ptr.vmem [resolvable:$true] %s434
      %440 = dma.vmem_to_hbm [thread:$0]  %s435, 128, %s3, [#allocation4], 128, 128, 8
    $region25: #{_task_shared_pallas.1} parent=1 // pred_fallthru
      _
    // Predicated region
    $region26: #{_task_shared_pallas.1} parent=1 // pred_check
      _
    $region27: #{_task_shared_pallas.1} parent=1 // pred_check_branch
      %442 = sbr.rel (0) target = $region29
    $region28: #{_task_shared_pallas.1} parent=1 // pred_region
      %s444 = ssub.s32 2048, 128
      %445 = vsyncadd [#allocation9], %s444
      %s446 = sshll.u32 [#allocation8], 4
      %s447 = int_to_ptr.vmem [resolvable:$true] %s446
      %452 = dma.vmem_to_hbm [thread:$0]  %s447, 128, %s4, [#allocation9], 128, 128, 8
    $region29: #{_task_shared_pallas.1} parent=1 // pred_fallthru
      _
    // Predicated region
    $region30: #{_task_shared_pallas.1} parent=1 // pred_check
      _
    $region31: #{_task_shared_pallas.1} parent=1 // pred_check_branch
      %454 = sbr.rel (0) target = $region33
    $region32: #{_task_shared_pallas.1} parent=1 // pred_region
      %455 = dma.done [#allocation4], 2048
    $region33: #{_task_shared_pallas.1} parent=1 // pred_fallthru
      _
    // Predicated region
    $region34: #{_task_shared_pallas.1} parent=1 // pred_check
      _
    $region35: #{_task_shared_pallas.1} parent=1 // pred_check_branch
      %457 = sbr.rel (0) target = $region37
    $region36: #{_task_shared_pallas.1} parent=1 // pred_region
      %458 = dma.done [#allocation9], 2048
    $region37: #{_task_shared_pallas.1} parent=1 // pred_fallthru
      _
    %459 = vsyncpa [#allocation3], 1
    %460 = vsyncpa [#allocation6], 1
    %461 = vsyncpa [#allocation4], 1
    %462 = vsyncpa [#allocation9], 1

</llo_original>
